<compile_context>
chip_gen: v5e
topology: v5e:2x2
jax: 0.10.0
libtpu: 0.0.40
codegen_flags: <defaults>
</compile_context>

<pallas_src>
import math

import jax
import jax.numpy as jnp
import numpy as np
from jax.experimental import pallas as pl
from jax.experimental.pallas import tpu as pltpu

# ---- module hyper-parameters (from __init__ defaults) -----------------------
GUIDANCE_SCALE = 100.0
NUM_TRAIN_TIMESTEPS = 1000
MIN_STEP_PERCENT = 0.02
MAX_STEP_PERCENT = 0.75
LAMBDA_LATENT_SDS = 1.0
LAMBDA_IMAGE_SDS = 0.01

_LANES = 128
_SUBLANES = 8


def _round_up(x, m):
    return ((x + m - 1) // m) * m


def _image_tile_target_bytes():
    """Per-(TR,128) block byte budget: ~1 MiB keeps v5e/v6e at >=85% of the HBM
    roofline; ~3 MiB on v7x amortizes the ~0.35us per-grid-step overhead
    against the much faster (3.2 TB/s) HBM."""
    try:
        kind = jax.devices()[0].device_kind.lower()
    except Exception:
        kind = ""
    return (3 << 20) if "v7" in kind else (1 << 20)


def _pick_image_tiles(total_rows, itemsize, override=None):
    """Choose (tile_rows, n_tiles, padded_rows).  tile_rows is a multiple of 16
    (valid for bf16 and f32 blocks); awkward row counts are handled by
    zero-padding instead of collapsing to tiny tiles."""
    if override is not None:
        tr = int(override)
        if tr <= 0 or tr % 16:
            raise ValueError(f"image_tile_rows={tr} must be a positive multiple of 16")
    else:
        max_rows = max(512, (_image_tile_target_bytes() // (_LANES * itemsize)) // 16 * 16)
        n_tiles = max(1, -(-total_rows // max_rows))
        tr = _round_up(max(1, -(-total_rows // n_tiles)), 16)
    n_tiles = max(1, -(-total_rows // tr))
    return tr, n_tiles, n_tiles * tr


def sdspp_train_step(ac_t, latents, noise, noise_pred_cond, noise_pred_uncond,
                     noise_pred_learnable, images, images_pred_raw,
                     *, image_tile_rows=None):
    """SDS++ train_step (post-network math) as a Pallas TPU kernel.

    ac_t: (B,) = alphas_cumprod[t] per view.  latents / noise predictions are
    NCHW float32; images / images_pred_raw are NCHW in their native network
    dtype (bf16 recommended) and are upcast to f32 per tile inside the kernel.
    Returns (latents_pred, loss_latent_sds, loss_image_sds, loss_embedding).
    """
    B = latents.shape[0]
    NL = math.prod(latents.shape[1:])
    NI = math.prod(images.shape[1:])
    if NL % _LANES or NI % _LANES:
        raise ValueError("latent / image element counts must be multiples of 128")
    RL = NL // _LANES                       # latent rows per view
    RLp = _round_up(RL, _SUBLANES)          # padded so (RLp/8,8,128) reshapes work
    RI = NI // _LANES                       # image rows per view (streamed)

    is_img = jnp.dtype(images.dtype).itemsize
    is_imgp = jnp.dtype(images_pred_raw.dtype).itemsize
    TR, n_img_tiles, RI_pad = _pick_image_tiles(RI, max(is_img, is_imgp), image_tile_rows)

    # ---- wrapper-side per-view coefficients (pure functions of ac_t) --------
    ac = jnp.asarray(ac_t, jnp.float32)                       # (B,)
    alpha = jnp.sqrt(ac)                                      # alphas_cumprod[t]**0.5
    sigma = jnp.sqrt(1.0 - alpha)                             # (1 - alpha)**0.5 (as in torch)
    inv_alpha = 1.0 / alpha
    # latents_pred = (add_noise(lat) - sigma*(cfg(noise_pred) - npl + noise)) / alpha
    # folded into  lat + k_n*noise + k_c*npc + k_u*npu + k_l*npl :
    k_n = (jnp.sqrt(1.0 - ac) - sigma) * inv_alpha
    k_c = -(sigma * GUIDANCE_SCALE) * inv_alpha
    k_u = -(sigma * (1.0 - GUIDANCE_SCALE)) * inv_alpha
    k_l = sigma * inv_alpha
    # NOTE: coef -> inf as ac_t -> 1 (t -> 0); min_step_percent keeps t away from 0.
    coef = (1.0 - ac) * alpha / sigma                         # w * alpha / sigma, (B,)
    kcoef = jnp.stack([k_n, k_c, k_u, k_l], axis=1)           # (B, 4) -> SMEM via prefetch

    # ---- lane-dense row layouts ---------------------------------------------
    def lat_rows(x):
        r = jnp.asarray(x, jnp.float32).reshape(B, RL, _LANES)
        if RLp != RL:
            r = jnp.pad(r, ((0, 0), (0, RLp - RL), (0, 0)))
        return r

    # single stacked latent input: [lat | noise | npc | npu | npl] along rows
    stack = jnp.concatenate([lat_rows(latents), lat_rows(noise),
                             lat_rows(noise_pred_cond), lat_rows(noise_pred_uncond),
                             lat_rows(noise_pred_learnable)], axis=1)  # (B, 5*RLp, 128)

    def img_rows(x):
        r = jnp.asarray(x).reshape(B, RI, _LANES)              # keep native dtype
        if RI_pad != RI:
            r = jnp.pad(r, ((0, 0), (0, RI_pad - RI), (0, 0)))  # zeros -> 0 SSE
        return r

    img3 = img_rows(images)
    imgp3 = img_rows(images_pred_raw)

    # ---- kernel --------------------------------------------------------------
    def kernel(kc_ref, stack_ref, img_ref, imgp_ref, latpred_ref, part_ref):
        b = pl.program_id(0)
        j = pl.program_id(1)

        # per-view latent math: once per view, at its first image tile
        @pl.when(j == 0)
        def _latent():
            kn = kc_ref[b, 0]
            kc = kc_ref[b, 1]
            ku = kc_ref[b, 2]
            kl = kc_ref[b, 3]
            lat = stack_ref[pl.ds(0 * RLp, RLp), :]
            noi = stack_ref[pl.ds(1 * RLp, RLp), :]
            npc = stack_ref[pl.ds(2 * RLp, RLp), :]
            npu = stack_ref[pl.ds(3 * RLp, RLp), :]
            npl = stack_ref[pl.ds(4 * RLp, RLp), :]
            delta = kn * noi + kc * npc + ku * npu + kl * npl    # = latents_pred - latents
            latpred_ref[...] = lat + delta
            demb = npl - noi
            # lane-preserving (8,128) partial sums (pure VPU adds)
            part_ref[pl.ds(0, _SUBLANES), :] = (
                (delta * delta).reshape(RLp // _SUBLANES, _SUBLANES, _LANES).sum(axis=0))
            part_ref[pl.ds(16, _SUBLANES), :] = (
                (demb * demb).reshape(RLp // _SUBLANES, _SUBLANES, _LANES).sum(axis=0))
            part_ref[pl.ds(8, _SUBLANES), :] = jnp.zeros((_SUBLANES, _LANES), jnp.float32)

        # image tile work (every grid step): upcast, clamp, squared diff, accumulate
        imgp_c = jnp.clip(imgp_ref[...].astype(jnp.float32), -1.0, 1.0)
        d = img_ref[...].astype(jnp.float32) - imgp_c
        tile_part = (d * d).reshape(TR // _SUBLANES, _SUBLANES, _LANES).sum(axis=0)
        part_ref[pl.ds(8, _SUBLANES), :] = part_ref[pl.ds(8, _SUBLANES), :] + tile_part

    stack_spec = pl.BlockSpec((None, 5 * RLp, _LANES), lambda b, j, kc: (b, 0, 0))
    img_spec = pl.BlockSpec((None, TR, _LANES), lambda b, j, kc: (b, j, 0))
    latpred_spec = pl.BlockSpec((None, RLp, _LANES), lambda b, j, kc: (b, 0, 0))
    part_spec = pl.BlockSpec((None, 24, _LANES), lambda b, j, kc: (b, 0, 0))

    grid_spec = pltpu.PrefetchScalarGridSpec(
        num_scalar_prefetch=1,                    # kcoef -> SMEM
        grid=(B, n_img_tiles),
        in_specs=[stack_spec, img_spec, img_spec],
        out_specs=[latpred_spec, part_spec],
        scratch_shapes=[],
    )

    # double-buffered VMEM footprint, with headroom; capped so it is safe on
    # every chip (<= v7x scoped default of 32 MiB)
    vmem_need = 2 * (TR * _LANES * (is_img + is_imgp)
                     + 5 * RLp * _LANES * 4
                     + RLp * _LANES * 4
                     + 24 * _LANES * 4)
    vmem_limit = int(min(32 << 20, max(16 << 20, 2 * vmem_need)))

    latpred3, partials = pl.pallas_call(
        kernel,
        out_shape=(jax.ShapeDtypeStruct((B, RLp, _LANES), jnp.float32),
                   jax.ShapeDtypeStruct((B, 24, _LANES), jnp.float32)),
        grid_spec=grid_spec,
        compiler_params=pltpu.CompilerParams(
            # per-view partials -> no cross-view coupling -> view axis shardable
            dimension_semantics=("parallel", "arbitrary"),
            vmem_limit_bytes=vmem_limit),
    )(kcoef, stack, img3, imgp3)

    # ---- tiny final reductions + coef combine in plain JAX -------------------
    sse = jnp.sum(partials.reshape(B, 3, _SUBLANES * _LANES), axis=-1)  # (B,3)
    sum_coef = jnp.sum(coef)
    inv_B = 1.0 / float(B)
    # PyTorch: (sse.sum([1,2,3]) * w * alpha / sigma).sum() / B broadcasts a
    # (B,) against (B,1,1,1) -> outer product; total = sum(sse)*sum(coef)/B.
    loss_latent_sds = jnp.sum(sse[:, 0]) * sum_coef * inv_B
    loss_image_sds = jnp.sum(sse[:, 1]) * sum_coef * inv_B
    loss_embedding = jnp.sum(sse[:, 2]) / float(B * NL)                 # mse 'mean'

    latents_pred = latpred3[:, :RL, :].reshape(latents.shape)
    return latents_pred, loss_latent_sds, loss_image_sds, loss_embedding


def make_alphas_cumprod(n=NUM_TRAIN_TIMESTEPS):
    """Deterministic SD-2.1 'scaled_linear' beta schedule (no checkpoint load)."""
    betas = jnp.linspace(0.00085 ** 0.5, 0.012 ** 0.5, n, dtype=jnp.float32) ** 2
    alphas = 1.0 - betas
    return jnp.cumprod(alphas)


def _reference(ac, lat, noise, npc, npu, npl, img, imgp_raw):
    """Pure-JAX transcription of the PyTorch train_step math (post-network)."""
    f32 = lambda x: jnp.asarray(x, jnp.float32)
    lat, noise, npc, npu, npl = map(f32, (lat, noise, npc, npu, npl))
    img, imgp_raw = f32(img), f32(imgp_raw)
    B = lat.shape[0]
    acb = f32(ac).reshape(B, 1, 1, 1)
    lat_noisy = jnp.sqrt(acb) * lat + jnp.sqrt(1.0 - acb) * noise
    np_cfg = npu + GUIDANCE_SCALE * (npc - npu)
    w = 1.0 - acb
    alpha = jnp.sqrt(acb)
    sigma = jnp.sqrt(1.0 - alpha)
    lat_pred = (lat_noisy - sigma * (np_cfg - npl + noise)) / alpha
    sse_lat = jnp.sum((lat - lat_pred) ** 2, axis=(1, 2, 3))          # (B,)
    img_pred = jnp.clip(imgp_raw, -1.0, 1.0)
    sse_img = jnp.sum((img - img_pred) ** 2, axis=(1, 2, 3))          # (B,)
    coef = w * alpha / sigma                                          # (B,1,1,1)
    loss_lat = jnp.sum(sse_lat * coef) / B      # reproduces torch (B,)x(B,1,1,1) outer bcast
    loss_img = jnp.sum(sse_img * coef) / B
    loss_emb = jnp.mean((npl - noise) ** 2)
    return lat_pred, loss_lat, loss_img, loss_emb


if __name__ == "__main__":
    key = jax.random.PRNGKey(0)

    # Small shapes: num_views (= batch) B=2, latent (4, 8, 8), image (3, 64, 64).
    B = 2
    C_LAT, H_LAT, W_LAT = 4, 8, 8
    C_IMG, H_IMG, W_IMG = 3, 64, 64

    # timestep schedule: iteration i = 0  ->  t = max_step (as in refine_gaussians)
    min_step = int(NUM_TRAIN_TIMESTEPS * MIN_STEP_PERCENT)
    max_step = int(NUM_TRAIN_TIMESTEPS * MAX_STEP_PERCENT)
    i_iter, total_iterations = 0, 500
    t = int((i_iter / total_iterations) ** 0.5 * (min_step - max_step) + max_step)

    alphas_cumprod = make_alphas_cumprod()
    ac_t = jnp.full((B,), alphas_cumprod[t], dtype=jnp.float32)   # t.repeat(num_views)

    ks = jax.random.split(key, 7)
    # TODO(synk): latents / noise predictions / decoded images come from the
    # pretrained VAE / UNet in the original module; here they are synthetic
    # deterministic stand-ins since those networks have no Pallas equivalent.
    latents = jax.random.normal(ks[0], (B, C_LAT, H_LAT, W_LAT), jnp.float32)
    noise = jax.random.normal(ks[1], (B, C_LAT, H_LAT, W_LAT), jnp.float32)
    noise_pred_cond = jax.random.normal(ks[2], (B, C_LAT, H_LAT, W_LAT), jnp.float32)
    noise_pred_uncond = jax.random.normal(ks[3], (B, C_LAT, H_LAT, W_LAT), jnp.float32)
    noise_pred_learnable = jax.random.normal(ks[4], (B, C_LAT, H_LAT, W_LAT), jnp.float32)
    # image streams in the network's native bf16 (kernel upcasts per tile to f32)
    images = jax.random.uniform(ks[5], (B, C_IMG, H_IMG, W_IMG), jnp.float32,
                                -1.0, 1.0).astype(jnp.bfloat16)
    images_pred_raw = (1.5 * jax.random.normal(ks[6], (B, C_IMG, H_IMG, W_IMG),
                                               jnp.float32)).astype(jnp.bfloat16)

    # image_tile_rows=32 -> 3 image tiles per view, so the pipelined reduction
    # path is exercised even at toy shapes (auto-pick streams ~1-3 MiB tiles at
    # SD-scale shapes).
    latents_pred, loss_lat, loss_img, loss_emb = jax.block_until_ready(
        sdspp_train_step(ac_t, latents, noise, noise_pred_cond,
                         noise_pred_uncond, noise_pred_learnable,
                         images, images_pred_raw, image_tile_rows=32))

    # cross-check against a pure-JAX transcription of the PyTorch math
    lp_ref, ll_ref, li_ref, le_ref = _reference(
        ac_t, latents, noise, noise_pred_cond, noise_pred_uncond,
        noise_pred_learnable, images, images_pred_raw)
    np.testing.assert_allclose(np.asarray(latents_pred), np.asarray(lp_ref),
                               rtol=2e-3, atol=5e-2)
    np.testing.assert_allclose(float(loss_lat), float(ll_ref), rtol=2e-3)
    np.testing.assert_allclose(float(loss_img), float(li_ref), rtol=2e-3)
    np.testing.assert_allclose(float(loss_emb), float(le_ref), rtol=2e-3)

    # total loss (glue, as in refine_gaussians): lambda-weighted combination
    total_loss = (loss_lat * LAMBDA_LATENT_SDS
                  + loss_img * LAMBDA_IMAGE_SDS
                  + loss_emb)
    total_loss = jax.block_until_ready(total_loss)

    assert latents_pred.shape == (B, C_LAT, H_LAT, W_LAT)
    assert bool(jnp.isfinite(total_loss))
    print("KERNEL_OK")
</pallas_src>

<mosaic_0001>
module attributes {stable_mosaic.version = 11 : i64} {
  func.func @kernel(%arg0: i32, %arg1: i32, %arg2: memref<2x4xf32, #tpu.memory_space<smem>>, %arg3: memref<1x40x128xf32, #tpu.memory_space<vmem>>, %arg4: memref<1x32x128xbf16, #tpu.memory_space<vmem>>, %arg5: memref<1x32x128xbf16, #tpu.memory_space<vmem>>, %arg6: memref<1x8x128xf32, #tpu.memory_space<vmem>>, %arg7: memref<1x24x128xf32, #tpu.memory_space<vmem>>) attributes {dimension_semantics = [#tpu.dimension_semantics<parallel>, #tpu.dimension_semantics<arbitrary>], iteration_bounds = array<i64: 2, 3>, scalar_prefetch = 1 : i64, scratch_operands = 0 : i64, tpu.core_type = #tpu.core_type<tc>, window_params = [{transform_indices = @transform_0, window_bounds = array<i64: 1, 40, 128>}, {transform_indices = @transform_1, window_bounds = array<i64: 1, 32, 128>}, {transform_indices = @transform_2, window_bounds = array<i64: 1, 32, 128>}, {transform_indices = @transform_3, window_bounds = array<i64: 1, 8, 128>}, {transform_indices = @transform_4, window_bounds = array<i64: 1, 24, 128>}]} {
    %c0_i32 = arith.constant 0 : i32
    %0 = arith.cmpi eq, %arg1, %c0_i32 : i32
    %1 = arith.extui %0 : i1 to i32
    %c0_i32_0 = arith.constant 0 : i32
    %2 = arith.cmpi ne, %1, %c0_i32_0 : i32
    scf.if %2 {
      %23 = arith.index_cast %arg0 : i32 to index
      %c0_13 = arith.constant 0 : index
      %24 = memref.load %arg2[%23, %c0_13] : memref<2x4xf32, #tpu.memory_space<smem>>
      %25 = arith.index_cast %arg0 : i32 to index
      %c1 = arith.constant 1 : index
      %26 = memref.load %arg2[%25, %c1] : memref<2x4xf32, #tpu.memory_space<smem>>
      %27 = arith.index_cast %arg0 : i32 to index
      %c2 = arith.constant 2 : index
      %28 = memref.load %arg2[%27, %c2] : memref<2x4xf32, #tpu.memory_space<smem>>
      %29 = arith.index_cast %arg0 : i32 to index
      %c3 = arith.constant 3 : index
      %30 = memref.load %arg2[%29, %c3] : memref<2x4xf32, #tpu.memory_space<smem>>
      %c0_14 = arith.constant 0 : index
      %c0_15 = arith.constant 0 : index
      %c0_16 = arith.constant 0 : index
      %31 = vector.load %arg3[%c0_14, %c0_15, %c0_16] : memref<1x40x128xf32, #tpu.memory_space<vmem>>, vector<1x8x128xf32>
      %32 = vector.shape_cast %31 : vector<1x8x128xf32> to vector<8x128xf32>
      %c0_17 = arith.constant 0 : index
      %c8_18 = arith.constant 8 : index
      %c0_19 = arith.constant 0 : index
      %33 = vector.load %arg3[%c0_17, %c8_18, %c0_19] : memref<1x40x128xf32, #tpu.memory_space<vmem>>, vector<1x8x128xf32>
      %34 = vector.shape_cast %33 : vector<1x8x128xf32> to vector<8x128xf32>
      %c0_20 = arith.constant 0 : index
      %c16 = arith.constant 16 : index
      %c0_21 = arith.constant 0 : index
      %35 = vector.load %arg3[%c0_20, %c16, %c0_21] : memref<1x40x128xf32, #tpu.memory_space<vmem>>, vector<1x8x128xf32>
      %36 = vector.shape_cast %35 : vector<1x8x128xf32> to vector<8x128xf32>
      %c0_22 = arith.constant 0 : index
      %c24 = arith.constant 24 : index
      %c0_23 = arith.constant 0 : index
      %37 = vector.load %arg3[%c0_22, %c24, %c0_23] : memref<1x40x128xf32, #tpu.memory_space<vmem>>, vector<1x8x128xf32>
      %38 = vector.shape_cast %37 : vector<1x8x128xf32> to vector<8x128xf32>
      %c0_24 = arith.constant 0 : index
      %c32 = arith.constant 32 : index
      %c0_25 = arith.constant 0 : index
      %39 = vector.load %arg3[%c0_24, %c32, %c0_25] : memref<1x40x128xf32, #tpu.memory_space<vmem>>, vector<1x8x128xf32>
      %40 = vector.shape_cast %39 : vector<1x8x128xf32> to vector<8x128xf32>
      %41 = vector.broadcast %24 : f32 to vector<8x128xf32>
      %42 = arith.mulf %41, %34 : vector<8x128xf32>
      %43 = vector.broadcast %26 : f32 to vector<8x128xf32>
      %44 = arith.mulf %43, %36 : vector<8x128xf32>
      %45 = arith.addf %42, %44 : vector<8x128xf32>
      %46 = vector.broadcast %28 : f32 to vector<8x128xf32>
      %47 = arith.mulf %46, %38 : vector<8x128xf32>
      %48 = arith.addf %45, %47 : vector<8x128xf32>
      %49 = vector.broadcast %30 : f32 to vector<8x128xf32>
      %50 = arith.mulf %49, %40 : vector<8x128xf32>
      %51 = arith.addf %48, %50 : vector<8x128xf32>
      %52 = arith.addf %32, %51 : vector<8x128xf32>
      %c0_26 = arith.constant 0 : index
      %c0_27 = arith.constant 0 : index
      %c0_28 = arith.constant 0 : index
      %53 = vector.load %arg6[%c0_26, %c0_27, %c0_28] : memref<1x8x128xf32, #tpu.memory_space<vmem>>, vector<1x8x128xf32>
      %54 = vector.shape_cast %53 : vector<1x8x128xf32> to vector<8x128xf32>
      %55 = vector.shape_cast %52 : vector<8x128xf32> to vector<1x8x128xf32>
      tpu.vector_store %arg6[%c0_26, %c0_27, %c0_28], %55 {strides = array<i32>} : memref<1x8x128xf32, #tpu.memory_space<vmem>>, vector<1x8x128xf32>,
      %56 = arith.subf %40, %34 : vector<8x128xf32>
      %57 = arith.mulf %51, %51 : vector<8x128xf32>
      %58 = vector.shape_cast %57 : vector<8x128xf32> to vector<1x8x128xf32>
      %cst_29 = arith.constant dense<0.000000e+00> : vector<8x128xf32>
      %59 = vector.multi_reduction <add>, %58, %cst_29 [0] : vector<1x8x128xf32> to vector<8x128xf32>
      %c0_30 = arith.constant 0 : index
      %c0_31 = arith.constant 0 : index
      %c0_32 = arith.constant 0 : index
      %60 = vector.load %arg7[%c0_30, %c0_31, %c0_32] : memref<1x24x128xf32, #tpu.memory_space<vmem>>, vector<1x8x128xf32>
      %61 = vector.shape_cast %60 : vector<1x8x128xf32> to vector<8x128xf32>
      %62 = vector.shape_cast %59 : vector<8x128xf32> to vector<1x8x128xf32>
      tpu.vector_store %arg7[%c0_30, %c0_31, %c0_32], %62 {strides = array<i32>} : memref<1x24x128xf32, #tpu.memory_space<vmem>>, vector<1x8x128xf32>,
      %63 = arith.mulf %56, %56 : vector<8x128xf32>
      %64 = vector.shape_cast %63 : vector<8x128xf32> to vector<1x8x128xf32>
      %cst_33 = arith.constant dense<0.000000e+00> : vector<8x128xf32>
      %65 = vector.multi_reduction <add>, %64, %cst_33 [0] : vector<1x8x128xf32> to vector<8x128xf32>
      %c0_34 = arith.constant 0 : index
      %c16_35 = arith.constant 16 : index
      %c0_36 = arith.constant 0 : index
      %66 = vector.load %arg7[%c0_34, %c16_35, %c0_36] : memref<1x24x128xf32, #tpu.memory_space<vmem>>, vector<1x8x128xf32>
      %67 = vector.shape_cast %66 : vector<1x8x128xf32> to vector<8x128xf32>
      %68 = vector.shape_cast %65 : vector<8x128xf32> to vector<1x8x128xf32>
      tpu.vector_store %arg7[%c0_34, %c16_35, %c0_36], %68 {strides = array<i32>} : memref<1x24x128xf32, #tpu.memory_space<vmem>>, vector<1x8x128xf32>,
      %cst_37 = arith.constant 0.000000e+00 : f32
      %69 = vector.broadcast %cst_37 : f32 to vector<8x128xf32>
      %c0_38 = arith.constant 0 : index
      %c8_39 = arith.constant 8 : index
      %c0_40 = arith.constant 0 : index
      %70 = vector.load %arg7[%c0_38, %c8_39, %c0_40] : memref<1x24x128xf32, #tpu.memory_space<vmem>>, vector<1x8x128xf32>
      %71 = vector.shape_cast %70 : vector<1x8x128xf32> to vector<8x128xf32>
      %72 = vector.shape_cast %69 : vector<8x128xf32> to vector<1x8x128xf32>
      tpu.vector_store %arg7[%c0_38, %c8_39, %c0_40], %72 {strides = array<i32>} : memref<1x24x128xf32, #tpu.memory_space<vmem>>, vector<1x8x128xf32>,
    } else {
    }
    %c0 = arith.constant 0 : index
    %c0_1 = arith.constant 0 : index
    %c0_2 = arith.constant 0 : index
    %3 = vector.load %arg5[%c0, %c0_1, %c0_2] : memref<1x32x128xbf16, #tpu.memory_space<vmem>>, vector<1x32x128xbf16>
    %4 = vector.shape_cast %3 : vector<1x32x128xbf16> to vector<32x128xbf16>
    %5 = arith.extf %4 : vector<32x128xbf16> to vector<32x128xf32>
    %cst = arith.constant -1.000000e+00 : f32
    %cst_3 = arith.constant 1.000000e+00 : f32
    %6 = vector.broadcast %cst : f32 to vector<32x128xf32>
    %7 = arith.maximumf %6, %5 : vector<32x128xf32>
    %8 = vector.broadcast %cst_3 : f32 to vector<32x128xf32>
    %9 = arith.minimumf %8, %7 : vector<32x128xf32>
    %c0_4 = arith.constant 0 : index
    %c0_5 = arith.constant 0 : index
    %c0_6 = arith.constant 0 : index
    %10 = vector.load %arg4[%c0_4, %c0_5, %c0_6] : memref<1x32x128xbf16, #tpu.memory_space<vmem>>, vector<1x32x128xbf16>
    %11 = vector.shape_cast %10 : vector<1x32x128xbf16> to vector<32x128xbf16>
    %12 = arith.extf %11 : vector<32x128xbf16> to vector<32x128xf32>
    %13 = arith.subf %12, %9 : vector<32x128xf32>
    %14 = arith.mulf %13, %13 : vector<32x128xf32>
    %15 = vector.shape_cast %14 : vector<32x128xf32> to vector<4x8x128xf32>
    %cst_7 = arith.constant dense<0.000000e+00> : vector<8x128xf32>
    %16 = vector.multi_reduction <add>, %15, %cst_7 [0] : vector<4x8x128xf32> to vector<8x128xf32>
    %c0_8 = arith.constant 0 : index
    %c8 = arith.constant 8 : index
    %c0_9 = arith.constant 0 : index
    %17 = vector.load %arg7[%c0_8, %c8, %c0_9] : memref<1x24x128xf32, #tpu.memory_space<vmem>>, vector<1x8x128xf32>
    %18 = vector.shape_cast %17 : vector<1x8x128xf32> to vector<8x128xf32>
    %19 = arith.addf %18, %16 : vector<8x128xf32>
    %c0_10 = arith.constant 0 : index
    %c8_11 = arith.constant 8 : index
    %c0_12 = arith.constant 0 : index
    %20 = vector.load %arg7[%c0_10, %c8_11, %c0_12] : memref<1x24x128xf32, #tpu.memory_space<vmem>>, vector<1x8x128xf32>
    %21 = vector.shape_cast %20 : vector<1x8x128xf32> to vector<8x128xf32>
    %22 = vector.shape_cast %19 : vector<8x128xf32> to vector<1x8x128xf32>
    tpu.vector_store %arg7[%c0_10, %c8_11, %c0_12], %22 {strides = array<i32>} : memref<1x24x128xf32, #tpu.memory_space<vmem>>, vector<1x8x128xf32>,
    return
  }
  func.func @transform_0(%arg0: i32, %arg1: i32, %arg2: memref<2x4xf32, #tpu.memory_space<smem>>) -> (i32, i32, i32) {
    %c0_i32 = arith.constant 0 : i32
    %c0_i32_0 = arith.constant 0 : i32
    %c0_i32_1 = arith.constant 0 : i32
    return %arg0, %c0_i32, %c0_i32_0 : i32, i32, i32
  }
  func.func @transform_1(%arg0: i32, %arg1: i32, %arg2: memref<2x4xf32, #tpu.memory_space<smem>>) -> (i32, i32, i32) {
    %c0_i32 = arith.constant 0 : i32
    %c0_i32_0 = arith.constant 0 : i32
    return %arg0, %arg1, %c0_i32 : i32, i32, i32
  }
  func.func @transform_2(%arg0: i32, %arg1: i32, %arg2: memref<2x4xf32, #tpu.memory_space<smem>>) -> (i32, i32, i32) {
    %c0_i32 = arith.constant 0 : i32
    %c0_i32_0 = arith.constant 0 : i32
    return %arg0, %arg1, %c0_i32 : i32, i32, i32
  }
  func.func @transform_3(%arg0: i32, %arg1: i32, %arg2: memref<2x4xf32, #tpu.memory_space<smem>>) -> (i32, i32, i32) {
    %c0_i32 = arith.constant 0 : i32
    %c0_i32_0 = arith.constant 0 : i32
    %c0_i32_1 = arith.constant 0 : i32
    return %arg0, %c0_i32, %c0_i32_0 : i32, i32, i32
  }
  func.func @transform_4(%arg0: i32, %arg1: i32, %arg2: memref<2x4xf32, #tpu.memory_space<smem>>) -> (i32, i32, i32) {
    %c0_i32 = arith.constant 0 : i32
    %c0_i32_0 = arith.constant 0 : i32
    %c0_i32_1 = arith.constant 0 : i32
    return %arg0, %c0_i32, %c0_i32_0 : i32, i32, i32
  }
}

</mosaic_0001>

<llo_original>
// kernel: tpu_custom_call.1
$region0: #{tpu_custom_call.1}
  #allocation0 [shape = 'u32[]', space=smem, size = 0x4, offset = 0x4, fixed_abs, tag = 'smem constant byte address 0x4 - core index']
  #allocation1 [shape = 'u32[72,128]{1,0:T(1,128)}', space=vmem, size = 0x9000, scoped, tag = 'internal scratch']
  #allocation2 [shape = 's32[1]{0}', space=sflag, size = 0x4, scoped, tag = 'scoped memory for tpu_custom_call.1']
  #allocation3 [shape = 'u8[1024]{0}', space=smem, size = 0x400, scoped, tag = 'prefetched SMEM operand 0']
  %s0 = inlined_call_operand.hbm [shape: f32[2,4], index: 0, kind: input, shape index: {}]
  %s1 = inlined_call_operand.hbm [shape: f32[2,40,128], index: 1, kind: input, shape index: {}]
  %s2 = inlined_call_operand.hbm [shape: bf16[2,96,128], index: 2, kind: input, shape index: {}]
  %s3 = inlined_call_operand.hbm [shape: bf16[2,96,128], index: 3, kind: input, shape index: {}]
  %s4 = inlined_call_operand.hbm [shape: f32[2,8,128], index: 4, kind: output, shape index: {0}]
  %s5 = inlined_call_operand.hbm [shape: f32[2,24,128], index: 5, kind: output, shape index: {1}]
  %6 = xla_tuple %s4, %s5
  %s7 = sld [smem:[#allocation0]]
  $region69: #{tpu_custom_call.1} parent=0
    _
  %s9 = ssub.s32 1, %s7
  %s10 = scalar_select 0, %s9, %s7
  %s12 = sshll.u32 %s0, 4
  %s13 = int_to_ptr.hbm [resolvable:$true] %s12
  %15 = dma.hbm_to_smem %s13, 32, [#allocation3], [#allocation2]
  %17 = dma.done [#allocation2], 32
  %18 = sfence
  $region1: #{tpu_custom_call.1} parent=0
    #allocation4 [shape = 'u8[40960]{0}', space=vmem, size = 0xa000, scoped, tag = 'input window, operand 1']
    #allocation5 [shape = 's32[2]{0}', space=sflag, size = 0x8, scoped, tag = 'scoped memory for tpu_custom_call.1']
    #allocation6 [shape = 's32[2]{0}', space=sflag, size = 0x8, scoped, tag = 'scoped memory for tpu_custom_call.1']
    #allocation7 [shape = 'u8[16384]{0}', space=vmem, size = 0x4000, scoped, tag = 'input window, operand 2']
    #allocation8 [shape = 's32[2]{0}', space=sflag, size = 0x8, scoped, tag = 'scoped memory for tpu_custom_call.1']
    #allocation9 [shape = 'u8[16384]{0}', space=vmem, size = 0x4000, scoped, tag = 'input window, operand 3']
    #allocation10 [shape = 'u8[8192]{0}', space=vmem, size = 0x2000, scoped, tag = 'output window, operand 0']
    #allocation11 [shape = 'u8[24576]{0}', space=vmem, size = 0x6000, scoped, tag = 'output window, operand 1']
    #allocation12 [shape = 's32[2]{0}', space=sflag, size = 0x8, scoped, tag = 'scoped memory for tpu_custom_call.1']
    %19 = vsyncpa [#allocation5], 0
    %s20 = scalar_lea.sflag [#allocation5], 1
    %21 = vsyncpa %s20, 0
    %22 = vsyncpa [#allocation8], 0
    %s23 = scalar_lea.sflag [#allocation8], 1
    %24 = vsyncpa %s23, 0
    %25 = vsyncpa [#allocation6], 0
    %s26 = scalar_lea.sflag [#allocation6], 1
    %27 = vsyncpa %s26, 0
    %28 = vsyncpa [#allocation12], 0
    %s29 = scalar_lea.sflag [#allocation12], 1
    %30 = vsyncpa %s29, 0
    loop: start=0, step=1, limit=8
    $region2: #{tpu_custom_call.1} parent=1 // loop_pre_header
      _
    $region3: #{tpu_custom_call.1} parent=1 // loop_header
      %s32 = sphi 0, %s36
      %p33 = scmp.ge.s32.totalorder %s32, 8
      %s39 = sphi 0, %s51
      %s40 = sphi 0, %s47
      %s41 = sphi 0, %s39
      %s42 = sphi 0, %s40
      %s43 = sphi 0, %s41
      %s44 = sphi 0, %s42
      %s54 = sphi 0, %s56
      %s57 = sphi 0, %s54
      %s58 = sphi 0, %s57
      %s74 = sphi 0, %s58
      %s82 = sphi 0, %s84
      %s85 = sphi 0, %s82
      %s86 = sphi 0, %s85
      %s102 = sphi 0, %s86
      %s110 = sphi 0, %s112
      %s113 = sphi 0, %s110
      %s114 = sphi 0, %s113
      %s130 = sphi 0, %s114
      %s136 = sphi 0, %s138
      %s139 = sphi 0, %s136
      %s140 = sphi 0, %s139
      %s156 = sphi 0, %s140
      %s162 = sphi 0, %s164
      %s165 = sphi 0, %s162
      %s166 = sphi 0, %s165
      %s182 = sphi 0, %s166
    $region4: #{tpu_custom_call.1} parent=1 // loop_header_branch
      %35 = sbr.rel (%p33) target = $region8
    $region5: #{tpu_custom_call.1} parent=1 // loop_body
      %s37 = ssub.s32 %s32, 1
      %s38 = ssub.s32 %s32, 2
      %s45 = sadd.s32 1, %s40
      %p46 = scmp.ge.s32.totalorder %s45, 3
      %s47 = scalar_select %p46, 0, %s45
      %s48 = sadd.s32 1, %s39
      %s49 = scalar_select %p46, %s48, %s39
      %p50 = scmp.ge.s32.totalorder %s49, 2
      %s51 = scalar_select %p50, 0, %s49
      %s52 = ssub.s32 %s39, %s51
      %p53 = scmp.eq.s32.totalorder %s52, 0
      %s55 = sadd.s32 %s54, 1
      %s56 = scalar_select %p53, %s54, %s55
      %p59 = pneg %p53
      %p60 = scmp.eq.s32.totalorder %s32, 5
      %p61 = por %p59, %p60
      %p62 = scmp.ne.s32.totalorder %s54, %s57
      %p63 = scmp.eq.s32.totalorder %s32, 0
      %p64 = por %p62, %p63
      %p65 = scmp.ne.s32.totalorder %s54, %s57
      %p66 = scmp.eq.s32.totalorder %s37, 5
      %p67 = por %p65, %p66
      %p68 = scmp.ne.s32.totalorder %s57, %s58
      %p69 = scmp.eq.s32.totalorder %s37, 0
      %p70 = por %p68, %p69
      %p71 = scmp.ne.s32.totalorder %s57, %s58
      %p72 = scmp.eq.s32.totalorder %s38, 5
      %p73 = por %p71, %p72
      %p75 = scmp.ne.s32.totalorder %s58, %s74
      %p76 = scmp.eq.s32.totalorder %s38, 0
      %p77 = por %p75, %p76
      %s78 = ssub.s32 %s39, %s51
      %s79 = ssub.s32 %s40, %s47
      %s80 = sor.u32 %s78, %s79
      %p81 = scmp.eq.s32.totalorder %s80, 0
      %s83 = sadd.s32 %s82, 1
      %s84 = scalar_select %p81, %s82, %s83
      %p87 = pneg %p81
      %p88 = scmp.eq.s32.totalorder %s32, 5
      %p89 = por %p87, %p88
      %p90 = scmp.ne.s32.totalorder %s82, %s85
      %p91 = scmp.eq.s32.totalorder %s32, 0
      %p92 = por %p90, %p91
      %p93 = scmp.ne.s32.totalorder %s82, %s85
      %p94 = scmp.eq.s32.totalorder %s37, 5
      %p95 = por %p93, %p94
      %p96 = scmp.ne.s32.totalorder %s85, %s86
      %p97 = scmp.eq.s32.totalorder %s37, 0
      %p98 = por %p96, %p97
      %p99 = scmp.ne.s32.totalorder %s85, %s86
      %p100 = scmp.eq.s32.totalorder %s38, 5
      %p101 = por %p99, %p100
      %p103 = scmp.ne.s32.totalorder %s86, %s102
      %p104 = scmp.eq.s32.totalorder %s38, 0
      %p105 = por %p103, %p104
      %s106 = ssub.s32 %s39, %s51
      %s107 = ssub.s32 %s40, %s47
      %s108 = sor.u32 %s106, %s107
      %p109 = scmp.eq.s32.totalorder %s108, 0
      %s111 = sadd.s32 %s110, 1
      %s112 = scalar_select %p109, %s110, %s111
      %p115 = pneg %p109
      %p116 = scmp.eq.s32.totalorder %s32, 5
      %p117 = por %p115, %p116
      %p118 = scmp.ne.s32.totalorder %s110, %s113
      %p119 = scmp.eq.s32.totalorder %s32, 0
      %p120 = por %p118, %p119
      %p121 = scmp.ne.s32.totalorder %s110, %s113
      %p122 = scmp.eq.s32.totalorder %s37, 5
      %p123 = por %p121, %p122
      %p124 = scmp.ne.s32.totalorder %s113, %s114
      %p125 = scmp.eq.s32.totalorder %s37, 0
      %p126 = por %p124, %p125
      %p127 = scmp.ne.s32.totalorder %s113, %s114
      %p128 = scmp.eq.s32.totalorder %s38, 5
      %p129 = por %p127, %p128
      %p131 = scmp.ne.s32.totalorder %s114, %s130
      %p132 = scmp.eq.s32.totalorder %s38, 0
      %p133 = por %p131, %p132
      %s134 = ssub.s32 %s39, %s51
      %p135 = scmp.eq.s32.totalorder %s134, 0
      %s137 = sadd.s32 %s136, 1
      %s138 = scalar_select %p135, %s136, %s137
      %p141 = pneg %p135
      %p142 = scmp.eq.s32.totalorder %s32, 5
      %p143 = por %p141, %p142
      %p144 = scmp.ne.s32.totalorder %s136, %s139
      %p145 = scmp.eq.s32.totalorder %s32, 0
      %p146 = por %p144, %p145
      %p147 = scmp.ne.s32.totalorder %s136, %s139
      %p148 = scmp.eq.s32.totalorder %s37, 5
      %p149 = por %p147, %p148
      %p150 = scmp.ne.s32.totalorder %s139, %s140
      %p151 = scmp.eq.s32.totalorder %s37, 0
      %p152 = por %p150, %p151
      %p153 = scmp.ne.s32.totalorder %s139, %s140
      %p154 = scmp.eq.s32.totalorder %s38, 5
      %p155 = por %p153, %p154
      %p157 = scmp.ne.s32.totalorder %s140, %s156
      %p158 = scmp.eq.s32.totalorder %s38, 0
      %p159 = por %p157, %p158
      %s160 = ssub.s32 %s39, %s51
      %p161 = scmp.eq.s32.totalorder %s160, 0
      %s163 = sadd.s32 %s162, 1
      %s164 = scalar_select %p161, %s162, %s163
      %p167 = pneg %p161
      %p168 = scmp.eq.s32.totalorder %s32, 5
      %p169 = por %p167, %p168
      %p170 = scmp.ne.s32.totalorder %s162, %s165
      %p171 = scmp.eq.s32.totalorder %s32, 0
      %p172 = por %p170, %p171
      %p173 = scmp.ne.s32.totalorder %s162, %s165
      %p174 = scmp.eq.s32.totalorder %s37, 5
      %p175 = por %p173, %p174
      %p176 = scmp.ne.s32.totalorder %s165, %s166
      %p177 = scmp.eq.s32.totalorder %s37, 0
      %p178 = por %p176, %p177
      %p179 = scmp.ne.s32.totalorder %s165, %s166
      %p180 = scmp.eq.s32.totalorder %s38, 5
      %p181 = por %p179, %p180
      %p183 = scmp.ne.s32.totalorder %s166, %s182
      %p184 = scmp.eq.s32.totalorder %s38, 0
      %p185 = por %p183, %p184
      %p186 = scmp.le.s32.totalorder 1, %s32
      %p187 = scmp.lt.s32.totalorder %s32, 7
      %p188 = pnand %p186, %p187
      %p189 = pneg %p188
      // Predicated region
      $region9: #{tpu_custom_call.1} parent=5 // pred_check
        _
      $region10: #{tpu_custom_call.1} parent=5 // pred_check_branch
        %191 = sbr.rel (%p188) target = $region12
      $region11: #{tpu_custom_call.1} parent=5 // pred_region
        %s192 = ssub.s32 %s32, 1
      $region12: #{tpu_custom_call.1} parent=5 // pred_fallthru
        _
      %p193 = scmp.lt.s32.totalorder %s32, 6
      // Predicated region
      $region13: #{tpu_custom_call.1} parent=5 // pred_check
        %p194 = pneg %p193
      $region14: #{tpu_custom_call.1} parent=5 // pred_check_branch
        %196 = sbr.rel (%p194) target = $region16
      $region15: #{tpu_custom_call.1} parent=5 // pred_region
        // Predicated region
        $region17: #{tpu_custom_call.1} parent=15 // pred_check
          %p197 = pneg %p64
        $region18: #{tpu_custom_call.1} parent=15 // pred_check_branch
          %199 = sbr.rel (%p197) target = $region20
        $region19: #{tpu_custom_call.1} parent=15 // pred_region
          %s200 = sand.u32 %s54, 1
          %s201 = scalar_lea.sflag [#allocation5], %s200
          %s202 = sand.u32 %s54, 1
          %s203 = smul.addr %s202, 40
          %s204 = scalar_lea.vmem [#allocation4], %s203
          %206 = vsyncadd %s201, 0
          %s207 = smul.addr %s39, 5
          %s208 = smul.addr %s207, 8
          %s209 = scalar_lea.hbm %s1, %s208
          %s210 = sshll.u32 %s209, 4
          %s211 = int_to_ptr.hbm [resolvable:$true] %s210
          %s212 = sshll.u32 %s204, 4
          %s213 = int_to_ptr.vmem [resolvable:$true] %s212
          %218 = dma.hbm_to_vmem [thread:$0]  %s211, 640, %s213, %s201, 128, 128, 8
        $region20: #{tpu_custom_call.1} parent=15 // pred_fallthru
          _
        // Predicated region
        $region21: #{tpu_custom_call.1} parent=15 // pred_check
          %p219 = pneg %p92
        $region22: #{tpu_custom_call.1} parent=15 // pred_check_branch
          %221 = sbr.rel (%p219) target = $region24
        $region23: #{tpu_custom_call.1} parent=15 // pred_region
          %s222 = sand.u32 %s32, 1
          %s223 = scalar_lea.sflag [#allocation8], %s222
          %s224 = sand.u32 %s82, 1
          %s225 = smul.addr %s224, 16
          %s226 = scalar_lea.vmem [#allocation7], %s225
          %s227 = smul.u32 4, %s40
          %229 = vsyncadd %s223, 0
          %s230 = smul.addr %s39, 12
          %s231 = sadd.s32 %s227, %s230
          %s232 = smul.addr %s231, 4
          %s233 = scalar_lea.hbm %s2, %s232
          %s234 = sshll.u32 %s233, 4
          %s235 = int_to_ptr.hbm [resolvable:$true] %s234
          %s236 = sshll.u32 %s226, 4
          %s237 = int_to_ptr.vmem [resolvable:$true] %s236
          %242 = dma.hbm_to_vmem [thread:$0]  %s235, 256, %s237, %s223, 64, 64, 4
        $region24: #{tpu_custom_call.1} parent=15 // pred_fallthru
          _
        // Predicated region
        $region25: #{tpu_custom_call.1} parent=15 // pred_check
          %p243 = pneg %p120
        $region26: #{tpu_custom_call.1} parent=15 // pred_check_branch
          %245 = sbr.rel (%p243) target = $region28
        $region27: #{tpu_custom_call.1} parent=15 // pred_region
          %s246 = sand.u32 %s32, 1
          %s247 = scalar_lea.sflag [#allocation8], %s246
          %s248 = sand.u32 %s110, 1
          %s249 = smul.addr %s248, 16
          %s250 = scalar_lea.vmem [#allocation9], %s249
          %s251 = smul.u32 4, %s40
          %253 = vsyncadd %s247, 0
          %s254 = smul.addr %s39, 12
          %s255 = sadd.s32 %s251, %s254
          %s256 = smul.addr %s255, 4
          %s257 = scalar_lea.hbm %s3, %s256
          %s258 = sshll.u32 %s257, 4
          %s259 = int_to_ptr.hbm [resolvable:$true] %s258
          %s260 = sshll.u32 %s250, 4
          %s261 = int_to_ptr.vmem [resolvable:$true] %s260
          %266 = dma.hbm_to_vmem [thread:$0]  %s259, 256, %s261, %s247, 64, 64, 4
        $region28: #{tpu_custom_call.1} parent=15 // pred_fallthru
          _
      $region16: #{tpu_custom_call.1} parent=5 // pred_fallthru
        _
      %p267 = scmp.le.s32.totalorder 1, %s32
      %p268 = scmp.lt.s32.totalorder %s32, 7
      %p269 = pnand %p267, %p268
      %p270 = pneg %p269
      // Predicated region
      $region29: #{tpu_custom_call.1} parent=5 // pred_check
        _
      $region30: #{tpu_custom_call.1} parent=5 // pred_check_branch
        %272 = sbr.rel (%p269) target = $region32
      $region31: #{tpu_custom_call.1} parent=5 // pred_region
        %s273 = ssub.s32 %s32, 1
        %s274 = sand.u32 %s57, 1
        %s275 = scalar_lea.sflag [#allocation5], %s274
        %s276 = sand.u32 %s57, 1
        %s277 = smul.addr %s276, 40
        %s278 = scalar_lea.vmem [#allocation4], %s277
        // Predicated region
        $region33: #{tpu_custom_call.1} parent=31 // pred_check
          %p279 = pneg %p70
        $region34: #{tpu_custom_call.1} parent=31 // pred_check_branch
          %281 = sbr.rel (%p279) target = $region36
        $region35: #{tpu_custom_call.1} parent=31 // pred_region
          %283 = dma.done %s275, 640
        $region36: #{tpu_custom_call.1} parent=31 // pred_fallthru
          _
        %s284 = sand.u32 %s37, 1
        %s285 = scalar_lea.sflag [#allocation8], %s284
        %s286 = sand.u32 %s85, 1
        %s287 = smul.addr %s286, 16
        %s288 = scalar_lea.vmem [#allocation7], %s287
        // Predicated region
        $region37: #{tpu_custom_call.1} parent=31 // pred_check
          %p289 = pneg %p98
        $region38: #{tpu_custom_call.1} parent=31 // pred_check_branch
          %291 = sbr.rel (%p289) target = $region40
        $region39: #{tpu_custom_call.1} parent=31 // pred_region
          %293 = dma.done %s285, 256
        $region40: #{tpu_custom_call.1} parent=31 // pred_fallthru
          _
        %s294 = sand.u32 %s37, 1
        %s295 = scalar_lea.sflag [#allocation8], %s294
        %s296 = sand.u32 %s113, 1
        %s297 = smul.addr %s296, 16
        %s298 = scalar_lea.vmem [#allocation9], %s297
        // Predicated region
        $region41: #{tpu_custom_call.1} parent=31 // pred_check
          %p299 = pneg %p126
        $region42: #{tpu_custom_call.1} parent=31 // pred_check_branch
          %301 = sbr.rel (%p299) target = $region44
        $region43: #{tpu_custom_call.1} parent=31 // pred_region
          %303 = dma.done %s295, 256
        $region44: #{tpu_custom_call.1} parent=31 // pred_fallthru
          _
        %s304 = sand.u32 %s57, 1
        %s305 = scalar_lea.sflag [#allocation5], %s304
        %s306 = sand.u32 %s57, 1
        %s307 = smul.addr %s306, 40
        %s308 = scalar_lea.vmem [#allocation4], %s307
        %p309 = pneg %p70
        %p310 = pneg %p67
        %s311 = sand.u32 %s37, 1
        %s312 = scalar_lea.sflag [#allocation8], %s311
        %s313 = sand.u32 %s85, 1
        %s314 = smul.addr %s313, 16
        %s315 = scalar_lea.vmem [#allocation7], %s314
        %p316 = pneg %p98
        %p317 = pneg %p95
        %s318 = sand.u32 %s37, 1
        %s319 = scalar_lea.sflag [#allocation8], %s318
        %s320 = sand.u32 %s113, 1
        %s321 = smul.addr %s320, 16
        %s322 = scalar_lea.vmem [#allocation9], %s321
        %p323 = pneg %p126
        %p324 = pneg %p123
        %p325 = pneg %p152
        %p326 = pneg %p149
        %s327 = sand.u32 %s139, 1
        %s328 = scalar_lea.sflag [#allocation6], %s327
        %s329 = sand.u32 %s139, 1
        %s330 = smul.addr %s329, 8
        %s331 = scalar_lea.vmem [#allocation10], %s330
        %p332 = pneg %p178
        %p333 = pneg %p175
        %s334 = sand.u32 %s165, 1
        %s335 = scalar_lea.sflag [#allocation12], %s334
        %s336 = sand.u32 %s165, 1
        %s337 = smul.addr %s336, 24
        %s338 = scalar_lea.vmem [#allocation11], %s337
        %s339 = smul.u32 4, %s42
        %s340 = smul.u32 4, %s42
        %p341 = scmp.eq.s32.totalorder %s42, 0
        // Predicated region
        $region45: #{tpu_custom_call.1} parent=31 // pred_check
          %p342 = pneg %p341
        $region46: #{tpu_custom_call.1} parent=31 // pred_check_branch
          %344 = sbr.rel (%p342) target = $region48
        $region47: #{tpu_custom_call.1} parent=31 // pred_region
          %s345 = smul.u32 %s41, 128
          %s346 = sld [smem:[#allocation3 + %s345]]
          %s347 = sadd.s32 %s345, 1
          %s348 = sld [smem:[#allocation3 + %s347]]
          %s349 = sadd.s32 %s345, 2
          %s350 = sld [smem:[#allocation3 + %s349]]
          %s351 = sadd.s32 %s345, 3
          %s352 = sld [smem:[#allocation3 + %s351]]
          %v353 = vld [vmem:[%s278] sm:$0xff]
          %v354 = vld [vmem:[%s278 + $0x8] sm:$0xff]
          %v355 = vld [vmem:[%s278 + $0x10] sm:$0xff]
          %v356 = vld [vmem:[%s278 + $0x18] sm:$0xff]
          %v357 = vld [vmem:[%s278 + $0x20] sm:$0xff]
          %v358 = vstv %s346
          %v359 = vmul.f32 %v358, %v354
          %v360 = vstv %s348
          %v361 = vmul.f32 %v360, %v355
          %v362 = vadd.f32 %v359, %v361
          %v363 = vstv %s350
          %v364 = vmul.f32 %v363, %v356
          %v365 = vadd.f32 %v362, %v364
          %v366 = vstv %s352
          %v367 = vmul.f32 %v366, %v357
          %v368 = vadd.f32 %v365, %v367
          %v369 = vadd.f32 %v353, %v368
          %370 = vst [vmem:[%s331] sm:$0xff] %v369
          %v371 = vsub.f32 %v357, %v354
          %v372 = vmul.f32 %v368, %v368
          %v373 = vadd.f32 %v372, 0.0
          %374 = vst [vmem:[%s338] sm:$0xff] %v373
          %v375 = vmul.f32 %v371, %v371
          %v376 = vadd.f32 %v375, 0.0
          %377 = vst [vmem:[%s338 + $0x10] sm:$0xff] %v376
          %378 = vst [vmem:[%s338 + $0x8] sm:$0xff] 0.0
        $region48: #{tpu_custom_call.1} parent=31 // pred_fallthru
          _
        %v379 = vld [vmem:[%s298] sm:$0xf]
        %v380 = vld [vmem:[%s298 + $0x4] sm:$0xf]
        %v381 = vld [vmem:[%s298 + $0x8] sm:$0xf]
        %v382 = vld [vmem:[%s298 + $0xc] sm:$0xf]
        %v383 = vunpack.c.l.bf16 %v379
        %v384 = vunpack.c.l.bf16 %v380
        %v385 = vunpack.c.l.bf16 %v381
        %v386 = vunpack.c.l.bf16 %v382
        %v387 = vmax.f32 %v383, -1.0
        %v388 = vmax.f32 %v384, -1.0
        %v389 = vmax.f32 %v385, -1.0
        %v390 = vmax.f32 %v386, -1.0
        %v391 = vmin.f32 %v387, 1.0
        %v392 = vmin.f32 %v388, 1.0
        %v393 = vmin.f32 %v389, 1.0
        %v394 = vmin.f32 %v390, 1.0
        %v395 = vld [vmem:[%s288] sm:$0xf]
        %v396 = vld [vmem:[%s288 + $0x4] sm:$0xf]
        %v397 = vld [vmem:[%s288 + $0x8] sm:$0xf]
        %v398 = vld [vmem:[%s288 + $0xc] sm:$0xf]
        %v399 = vunpack.c.l.bf16 %v395
        %v400 = vunpack.c.l.bf16 %v396
        %v401 = vunpack.c.l.bf16 %v397
        %v402 = vunpack.c.l.bf16 %v398
        %v403 = vsub.f32 %v399, %v391
        %v404 = vsub.f32 %v400, %v392
        %v405 = vsub.f32 %v401, %v393
        %v406 = vsub.f32 %v402, %v394
        %v407 = vmul.f32 %v403, %v403
        %v408 = vmul.f32 %v404, %v404
        %v409 = vmul.f32 %v405, %v405
        %v410 = vmul.f32 %v406, %v406
        %v411 = vadd.f32 %v407, %v408
        %v412 = vadd.f32 %v411, %v409
        %v413 = vadd.f32 %v412, %v410
        %v414 = vld [vmem:[%s338 + $0x8] sm:$0xff]
        %v415 = vadd.f32 %v414, %v413
        %416 = vst [vmem:[%s338 + $0x8] sm:$0xff] %v415
        %s417 = sand.u32 %s139, 1
        %s418 = scalar_lea.sflag [#allocation6], %s417
        %s419 = sand.u32 %s139, 1
        %s420 = smul.addr %s419, 8
        %s421 = scalar_lea.vmem [#allocation10], %s420
        %s422 = sand.u32 %s165, 1
        %s423 = scalar_lea.sflag [#allocation12], %s422
        %s424 = sand.u32 %s165, 1
        %s425 = smul.addr %s424, 24
        %s426 = scalar_lea.vmem [#allocation11], %s425
        // Predicated region
        $region49: #{tpu_custom_call.1} parent=31 // pred_check
          %p427 = pneg %p149
        $region50: #{tpu_custom_call.1} parent=31 // pred_check_branch
          %429 = sbr.rel (%p427) target = $region52
        $region51: #{tpu_custom_call.1} parent=31 // pred_region
          %431 = vsyncadd %s418, 0
          %s432 = smul.addr %s41, 8
          %s433 = scalar_lea.hbm %s4, %s432
          %s435 = sshll.u32 %s421, 4
          %s436 = int_to_ptr.vmem [resolvable:$true] %s435
          %s437 = sshll.u32 %s433, 4
          %s438 = int_to_ptr.hbm [resolvable:$true] %s437
          %440 = dma.vmem_to_hbm [thread:$0]  %s436, 128, %s438, %s418
        $region52: #{tpu_custom_call.1} parent=31 // pred_fallthru
          _
        // Predicated region
        $region53: #{tpu_custom_call.1} parent=31 // pred_check
          %p441 = pneg %p175
        $region54: #{tpu_custom_call.1} parent=31 // pred_check_branch
          %443 = sbr.rel (%p441) target = $region56
        $region55: #{tpu_custom_call.1} parent=31 // pred_region
          %445 = vsyncadd %s423, 0
          %s446 = smul.addr %s41, 3
          %s447 = smul.addr %s446, 8
          %s448 = scalar_lea.hbm %s5, %s447
          %s449 = sshll.u32 %s426, 4
          %s450 = int_to_ptr.vmem [resolvable:$true] %s449
          %s451 = sshll.u32 %s448, 4
          %s452 = int_to_ptr.hbm [resolvable:$true] %s451
          %457 = dma.vmem_to_hbm [thread:$0]  %s450, 384, %s452, %s423, 128, 128, 8
        $region56: #{tpu_custom_call.1} parent=31 // pred_fallthru
          _
      $region32: #{tpu_custom_call.1} parent=5 // pred_fallthru
        _
      %p458 = scmp.le.s32.totalorder 2, %s32
      // Predicated region
      $region57: #{tpu_custom_call.1} parent=5 // pred_check
        %p459 = pneg %p458
      $region58: #{tpu_custom_call.1} parent=5 // pred_check_branch
        %461 = sbr.rel (%p459) target = $region60
      $region59: #{tpu_custom_call.1} parent=5 // pred_region
        %s462 = ssub.s32 %s32, 2
        // Predicated region
        $region61: #{tpu_custom_call.1} parent=59 // pred_check
          %p463 = pneg %p155
        $region62: #{tpu_custom_call.1} parent=59 // pred_check_branch
          %465 = sbr.rel (%p463) target = $region64
        $region63: #{tpu_custom_call.1} parent=59 // pred_region
          %s466 = sand.u32 %s140, 1
          %s467 = scalar_lea.sflag [#allocation6], %s466
          %s468 = sand.u32 %s140, 1
          %s469 = smul.addr %s468, 8
          %s470 = scalar_lea.vmem [#allocation10], %s469
          %472 = dma.done %s467, 128
        $region64: #{tpu_custom_call.1} parent=59 // pred_fallthru
          _
        // Predicated region
        $region65: #{tpu_custom_call.1} parent=59 // pred_check
          %p473 = pneg %p181
        $region66: #{tpu_custom_call.1} parent=59 // pred_check_branch
          %475 = sbr.rel (%p473) target = $region68
        $region67: #{tpu_custom_call.1} parent=59 // pred_region
          %s476 = sand.u32 %s166, 1
          %s477 = scalar_lea.sflag [#allocation12], %s476
          %s478 = sand.u32 %s166, 1
          %s479 = smul.addr %s478, 24
          %s480 = scalar_lea.vmem [#allocation11], %s479
          %482 = dma.done %s477, 384
        $region68: #{tpu_custom_call.1} parent=59 // pred_fallthru
          _
      $region60: #{tpu_custom_call.1} parent=5 // pred_fallthru
        _
    $region6: #{tpu_custom_call.1} parent=1 // loop_footer
      %s36 = sadd.s32 1, %s32
    $region7: #{tpu_custom_call.1} parent=1 // loop_footer_branch
      %31 = sbr.rel target = $region3
    $region8: #{tpu_custom_call.1} parent=1 // loop_exit
      _
    %483 = vsyncpa [#allocation5], 1
    %s484 = scalar_lea.sflag [#allocation5], 1
    %485 = vsyncpa %s484, 1
    %486 = vsyncpa [#allocation8], 1
    %s487 = scalar_lea.sflag [#allocation8], 1
    %488 = vsyncpa %s487, 1
    %489 = vsyncpa [#allocation6], 1
    %s490 = scalar_lea.sflag [#allocation6], 1
    %491 = vsyncpa %s490, 1
    %492 = vsyncpa [#allocation12], 1
    %s493 = scalar_lea.sflag [#allocation12], 1
    %494 = vsyncpa %s493, 1

</llo_original>
